<compile_context>
chip_gen: v6e
topology: v6e:2x2x1
jax: 0.10.0
libtpu: 0.0.40
codegen_flags: <defaults>
</compile_context>

<pallas_src>
from functools import partial

import jax
import jax.numpy as jnp
import numpy as np
from jax import lax
from jax.experimental import pallas as pl
from jax.experimental.pallas import tpu as pltpu

# ----------------------------- config ---------------------------------------
VOCAB = 128          # vocabulary size (lane-aligned)
HIDDEN = 32          # hidden size
BATCH = 2
PAD_ID = 0
BOS_ID = 1
EOS_ID = 2
TOP_K = 5            # config.top_k
TOP_P = 0.9          # config.top_p  (see TODO below)
MIN_LEN = 3          # min_length=3 in model.generate (HF: counts prompt too)
MAX_NEW_TOKENS = 8   # config.max_generation_length (new tokens)
NEG_INF = -1e30

# TODO(synk): top-p (nucleus) filtering needs an in-kernel sort + cumsum over
#             the vocab axis; only top-k filtering is implemented here.
# TODO(synk): num_beams (beam search) is not replicated; with do_sample=True
#             we model it as single-beam ancestral sampling.


# --------------------------- pallas kernel ----------------------------------
def generate_kernel(prompt_x_ref, ewx_ref, wh_ref, wo_ref, gumbel_ref,
                    tok_out_ref, *, prompt_len, min_len, top_k):
    """Fused prompt consumption + sampled autoregressive decoding.

    prompt_x_ref : [L, B, H]  precomputed E[prompt] @ Wx
    ewx_ref      : [V, H]     precomputed E @ Wx (fused embedding lookup table)
    wh_ref       : [H, H]     recurrent weight
    wo_ref       : [H, V]     output projection
    gumbel_ref   : [T, B, V]  precomputed Gumbel noise per decode step
    tok_out_ref  : [B, T]     sampled token ids (lane-dense, written once)
    """
    L, B, H = prompt_x_ref.shape
    V = ewx_ref.shape[0]
    T = gumbel_ref.shape[0]

    # hoisted iotas, reused across all steps
    col = lax.broadcasted_iota(jnp.int32, (B, V), 1)
    tcol = lax.broadcasted_iota(jnp.int32, (B, T), 1)
    is_eos_col = col == EOS_ID

    def cell(h, xproj):
        # h' = tanh(h @ Wh + emb @ Wx); the emb @ Wx matmul was pre-fused into
        # xproj (prompt) / one_hot @ (E @ Wx) (generation), so only one H x H
        # matmul remains on the recurrent path.
        return jnp.tanh(
            jnp.dot(h, wh_ref[...], preferred_element_type=jnp.float32) + xproj)

    # ---- phase 1: teacher-forced prompt consumption (sampling gated off) ----
    def prompt_body(t, h):
        return cell(h, prompt_x_ref[t])

    h = lax.fori_loop(0, L - 1, prompt_body, jnp.zeros((B, H), jnp.float32))

    # ---- phase 2: sampled generation, all state carried in VMEM/vregs -------
    def gen_body(step, carry):
        h, xproj, finished, tokens = carry
        h = cell(h, xproj)
        logits = jnp.dot(h, wo_ref[...], preferred_element_type=jnp.float32)

        # min_length: suppress EOS while total sequence length < min_len
        suppress = (prompt_len + step) < min_len
        logits = jnp.where(jnp.logical_and(suppress, is_eos_col), NEG_INF, logits)

        # top-k filter: peel the row max (top_k - 1) times to find the k-th
        # largest value, then keep logits >= that threshold.
        # NOTE: exact only for distinct values; float ties could admit > k.
        tmp = logits
        kth = jnp.max(tmp, axis=-1, keepdims=True)
        for _ in range(top_k - 1):
            tmp = jnp.where(tmp >= kth, NEG_INF, tmp)
            kth = jnp.max(tmp, axis=-1, keepdims=True)
        filtered = jnp.where(logits >= kth, logits, NEG_INF)

        # do_sample=True: Gumbel-max sampling (noise precomputed host-side)
        scores = filtered + gumbel_ref[step]
        row_max = jnp.max(scores, axis=-1, keepdims=True)
        tok = jnp.min(jnp.where(scores >= row_max, col, V), axis=-1,
                      keepdims=True)                                  # [B, 1]

        tok = jnp.where(finished > 0, PAD_ID, tok)        # pad finished rows
        finished = jnp.where(tok == EOS_ID, 1, finished)  # mark newly finished
        tokens = jnp.where(tcol == step, jnp.broadcast_to(tok, (B, T)), tokens)

        # next-step input: emb @ Wx == one_hot(tok) @ (E @ Wx); finished rows
        # are fed PAD, matching the reference loop.
        next_tok = jnp.where(finished > 0, PAD_ID, tok)
        onehot = (col == next_tok).astype(jnp.float32)
        xproj = jnp.dot(onehot, ewx_ref[...], preferred_element_type=jnp.float32)
        return h, xproj, finished, tokens

    carry0 = (h,
              prompt_x_ref[L - 1],
              jnp.zeros((B, 1), jnp.int32),
              jnp.zeros((B, T), jnp.int32))
    _, _, _, tokens = lax.fori_loop(0, T, gen_body, carry0)

    # single lane-dense token writeback for the whole generation
    tok_out_ref[...] = tokens


# ------------------------------ generate ------------------------------------
@jax.jit
def generate(input_ids, E, Wh, Wx, Wo, key):
    """model.generate(...): one fused Pallas kernel for the whole decode loop."""
    B, L = input_ids.shape
    V, H = E.shape
    T = MAX_NEW_TOKENS

    # pad batch to a multiple of 8 sublanes for full-vreg VPU/XLU occupancy
    B_pad = max(8, ((B + 7) // 8) * 8)
    ids_pad = jnp.pad(input_ids, ((0, B_pad - B), (0, 0)),
                      constant_values=PAD_ID)

    # precompute (outside the kernel, once): prompt embedding projections,
    # the fused embedding-projection table, and per-step Gumbel noise.
    prompt_x = jnp.einsum("blh,hk->lbk", E[ids_pad], Wx)      # [L, B_pad, H]
    EWx = jnp.dot(E, Wx)                                      # [V, H]
    gumbel = jax.random.gumbel(key, (T, B_pad, V), jnp.float32)

    vmem = pl.BlockSpec(memory_space=pltpu.MemorySpace.VMEM)
    new_tokens = pl.pallas_call(
        partial(generate_kernel, prompt_len=L, min_len=MIN_LEN, top_k=TOP_K),
        out_shape=jax.ShapeDtypeStruct((B_pad, T), jnp.int32),
        in_specs=[vmem, vmem, vmem, vmem, vmem],
        out_specs=vmem,
    )(prompt_x, EWx, Wh, Wo, gumbel)

    return jnp.concatenate([input_ids, new_tokens[:B]], axis=1)


# ------------------------- synthetic tokenizer -------------------------------
def tok_decode(ids, skip_special_tokens):
    specials = {PAD_ID, BOS_ID, EOS_ID}
    toks = [int(t) for t in ids]
    if skip_special_tokens:
        toks = [t for t in toks if t not in specials]
    else:
        # decode(..., ignore_tokens=[pad_token])
        toks = [t for t in toks if t != PAD_ID]
    return " ".join(f"tok{t}" for t in toks)


def pipeline_forward(input_ids, params, key):
    E, Wh, Wx, Wo = params
    generated_ids = generate(input_ids, E, Wh, Wx, Wo, key)
    generated_ids = jax.block_until_ready(generated_ids)
    gen_np = np.asarray(generated_ids)
    generated_sentences = [
        {
            "seqs": tok_decode(sent, skip_special_tokens=True),
            "seqs_with_special_tokens": tok_decode(sent, skip_special_tokens=False),
        }
        for sent in gen_np
    ]
    return generated_sentences, gen_np


# -------------------------------- main ---------------------------------------
if __name__ == "__main__":
    key = jax.random.PRNGKey(0)
    k_e, k_h, k_x, k_o, k_g = jax.random.split(key, 5)
    E = jax.random.normal(k_e, (VOCAB, HIDDEN), jnp.float32) * 0.5
    Wh = jax.random.normal(k_h, (HIDDEN, HIDDEN), jnp.float32) * (1.0 / np.sqrt(HIDDEN))
    Wx = jax.random.normal(k_x, (HIDDEN, HIDDEN), jnp.float32) * (1.0 / np.sqrt(HIDDEN))
    Wo = jax.random.normal(k_o, (HIDDEN, VOCAB), jnp.float32) * (1.0 / np.sqrt(HIDDEN))
    params = (E, Wh, Wx, Wo)

    # small deterministic "tokenized" prompt: batch=2, seq=4, starting with BOS
    input_ids = jnp.array([[BOS_ID, 17, 42, 99],
                           [BOS_ID, 5, 23, 64]], dtype=jnp.int32)

    sentences, gen_np = pipeline_forward(input_ids, params, k_g)

    # sanity checks
    assert len(sentences) == BATCH
    assert all("seqs" in s and "seqs_with_special_tokens" in s for s in sentences)
    assert gen_np.shape == (BATCH, input_ids.shape[1] + MAX_NEW_TOKENS)
    assert np.all(gen_np >= 0) and np.all(gen_np < VOCAB)
    # prompt must be echoed verbatim at the front of each generated sequence
    assert np.array_equal(gen_np[:, : input_ids.shape[1]], np.asarray(input_ids))

    print("KERNEL_OK")
</pallas_src>

<mosaic_0001>
module attributes {stable_mosaic.version = 11 : i64} {
  func.func @generate_kernel(%arg0: memref<4x8x32xf32, #tpu.memory_space<vmem>>, %arg1: memref<128x32xf32, #tpu.memory_space<vmem>>, %arg2: memref<32x32xf32, #tpu.memory_space<vmem>>, %arg3: memref<32x128xf32, #tpu.memory_space<vmem>>, %arg4: memref<8x8x128xf32, #tpu.memory_space<vmem>>, %arg5: memref<8x8xi32, #tpu.memory_space<vmem>>) attributes {dimension_semantics = [], scalar_prefetch = 0 : i64, scratch_operands = 0 : i64, tpu.core_type = #tpu.core_type<tc>} {
    %0 = tpu.iota {dimensions = array<i32: 1>} : vector<8x128xi32>
    %1 = tpu.iota {dimensions = array<i32: 1>} : vector<8x8xi32>
    %c2_i32 = arith.constant 2 : i32
    %2 = vector.broadcast %c2_i32 : i32 to vector<8x128xi32>
    %3 = arith.cmpi eq, %0, %2 : vector<8x128xi32>
    %cst = arith.constant 0.000000e+00 : f32
    %4 = vector.broadcast %cst : f32 to vector<8x32xf32>
    %c0_i32 = arith.constant 0 : i32
    %c3_i32 = arith.constant 3 : i32
    %5 = arith.addi %c0_i32, %c3_i32 : i32
    %c1_i32 = arith.constant 1 : i32
    %6 = scf.for %arg6 = %c0_i32 to %5 step %c1_i32 iter_args(%arg7 = %4) -> (vector<8x32xf32>)  : i32 {
      %14 = arith.index_cast %arg6 : i32 to index
      %c0_9 = arith.constant 0 : index
      %c0_10 = arith.constant 0 : index
      %15 = vector.load %arg0[%14, %c0_9, %c0_10] : memref<4x8x32xf32, #tpu.memory_space<vmem>>, vector<1x8x32xf32>
      %16 = vector.shape_cast %15 : vector<1x8x32xf32> to vector<8x32xf32>
      %c0_11 = arith.constant 0 : index
      %c0_12 = arith.constant 0 : index
      %17 = vector.load %arg2[%c0_11, %c0_12] : memref<32x32xf32, #tpu.memory_space<vmem>>, vector<32x32xf32>
      %cst_13 = arith.constant dense<0.000000e+00> : vector<8x32xf32>
      %18 = tpu.matmul %arg7, %17, %cst_13 {dimension_numbers = #tpu.dot_dimension_numbers<[1], [0], [0], [1], [0, 0, 1, 1], [], []>} : vector<8x32xf32>, vector<32x32xf32>, vector<8x32xf32> -> vector<8x32xf32>
      %19 = arith.addf %18, %16 : vector<8x32xf32>
      %20 = math.tanh %19 : vector<8x32xf32>
      scf.yield %20 : vector<8x32xf32>
    }
    %c3_i32_0 = arith.constant 3 : i32
    %c3 = arith.constant 3 : index
    %c0 = arith.constant 0 : index
    %c0_1 = arith.constant 0 : index
    %7 = vector.load %arg0[%c3, %c0, %c0_1] : memref<4x8x32xf32, #tpu.memory_space<vmem>>, vector<1x8x32xf32>
    %8 = vector.shape_cast %7 : vector<1x8x32xf32> to vector<8x32xf32>
    %c0_i32_2 = arith.constant 0 : i32
    %9 = vector.broadcast %c0_i32_2 : i32 to vector<8x1xi32>
    %c0_i32_3 = arith.constant 0 : i32
    %10 = vector.broadcast %c0_i32_3 : i32 to vector<8x8xi32>
    %c0_i32_4 = arith.constant 0 : i32
    %c8_i32 = arith.constant 8 : i32
    %11 = arith.addi %c0_i32_4, %c8_i32 : i32
    %c1_i32_5 = arith.constant 1 : i32
    %12:4 = scf.for %arg6 = %c0_i32_4 to %11 step %c1_i32_5 iter_args(%arg7 = %6, %arg8 = %8, %arg9 = %9, %arg10 = %10) -> (vector<8x32xf32>, vector<8x32xf32>, vector<8x1xi32>, vector<8x8xi32>)  : i32 {
      %c0_9 = arith.constant 0 : index
      %c0_10 = arith.constant 0 : index
      %14 = vector.load %arg2[%c0_9, %c0_10] : memref<32x32xf32, #tpu.memory_space<vmem>>, vector<32x32xf32>
      %cst_11 = arith.constant dense<0.000000e+00> : vector<8x32xf32>
      %15 = tpu.matmul %arg7, %14, %cst_11 {dimension_numbers = #tpu.dot_dimension_numbers<[1], [0], [0], [1], [0, 0, 1, 1], [], []>} : vector<8x32xf32>, vector<32x32xf32>, vector<8x32xf32> -> vector<8x32xf32>
      %16 = arith.addf %15, %arg8 : vector<8x32xf32>
      %17 = math.tanh %16 : vector<8x32xf32>
      %c0_12 = arith.constant 0 : index
      %c0_13 = arith.constant 0 : index
      %18 = vector.load %arg3[%c0_12, %c0_13] : memref<32x128xf32, #tpu.memory_space<vmem>>, vector<32x128xf32>
      %cst_14 = arith.constant dense<0.000000e+00> : vector<8x128xf32>
      %19 = tpu.matmul %17, %18, %cst_14 {dimension_numbers = #tpu.dot_dimension_numbers<[1], [0], [0], [1], [0, 0, 1, 1], [], []>} : vector<8x32xf32>, vector<32x128xf32>, vector<8x128xf32> -> vector<8x128xf32>
      %c4_i32 = arith.constant 4 : i32
      %20 = arith.addi %c4_i32, %arg6 : i32
      %c3_i32_15 = arith.constant 3 : i32
      %21 = arith.cmpi slt, %20, %c3_i32_15 : i32
      %22 = vector.broadcast %21 : i1 to vector<8x128xi1>
      %23 = arith.andi %22, %3 : vector<8x128xi1>
      %cst_16 = arith.constant -1.000000e+30 : f32
      %24 = vector.broadcast %cst_16 : f32 to vector<8x128xf32>
      %25 = arith.select %23, %24, %19 : vector<8x128xi1>, vector<8x128xf32>
      %cst_17 = arith.constant dense<0xFF800000> : vector<8xf32>
      %26 = vector.multi_reduction <maximumf>, %25, %cst_17 [1] : vector<8x128xf32> to vector<8xf32>
      %27 = vector.shape_cast %26 : vector<8xf32> to vector<8x1xf32>
      %28 = vector.broadcast %27 : vector<8x1xf32> to vector<8x128xf32>
      %29 = arith.cmpf oge, %25, %28 : vector<8x128xf32>
      %cst_18 = arith.constant -1.000000e+30 : f32
      %30 = vector.broadcast %cst_18 : f32 to vector<8x128xf32>
      %31 = arith.select %29, %30, %25 : vector<8x128xi1>, vector<8x128xf32>
      %cst_19 = arith.constant dense<0xFF800000> : vector<8xf32>
      %32 = vector.multi_reduction <maximumf>, %31, %cst_19 [1] : vector<8x128xf32> to vector<8xf32>
      %33 = vector.shape_cast %32 : vector<8xf32> to vector<8x1xf32>
      %34 = vector.broadcast %33 : vector<8x1xf32> to vector<8x128xf32>
      %35 = arith.cmpf oge, %31, %34 : vector<8x128xf32>
      %cst_20 = arith.constant -1.000000e+30 : f32
      %36 = vector.broadcast %cst_20 : f32 to vector<8x128xf32>
      %37 = arith.select %35, %36, %31 : vector<8x128xi1>, vector<8x128xf32>
      %cst_21 = arith.constant dense<0xFF800000> : vector<8xf32>
      %38 = vector.multi_reduction <maximumf>, %37, %cst_21 [1] : vector<8x128xf32> to vector<8xf32>
      %39 = vector.shape_cast %38 : vector<8xf32> to vector<8x1xf32>
      %40 = vector.broadcast %39 : vector<8x1xf32> to vector<8x128xf32>
      %41 = arith.cmpf oge, %37, %40 : vector<8x128xf32>
      %cst_22 = arith.constant -1.000000e+30 : f32
      %42 = vector.broadcast %cst_22 : f32 to vector<8x128xf32>
      %43 = arith.select %41, %42, %37 : vector<8x128xi1>, vector<8x128xf32>
      %cst_23 = arith.constant dense<0xFF800000> : vector<8xf32>
      %44 = vector.multi_reduction <maximumf>, %43, %cst_23 [1] : vector<8x128xf32> to vector<8xf32>
      %45 = vector.shape_cast %44 : vector<8xf32> to vector<8x1xf32>
      %46 = vector.broadcast %45 : vector<8x1xf32> to vector<8x128xf32>
      %47 = arith.cmpf oge, %43, %46 : vector<8x128xf32>
      %cst_24 = arith.constant -1.000000e+30 : f32
      %48 = vector.broadcast %cst_24 : f32 to vector<8x128xf32>
      %49 = arith.select %47, %48, %43 : vector<8x128xi1>, vector<8x128xf32>
      %cst_25 = arith.constant dense<0xFF800000> : vector<8xf32>
      %50 = vector.multi_reduction <maximumf>, %49, %cst_25 [1] : vector<8x128xf32> to vector<8xf32>
      %51 = vector.shape_cast %50 : vector<8xf32> to vector<8x1xf32>
      %52 = vector.broadcast %51 : vector<8x1xf32> to vector<8x128xf32>
      %53 = arith.cmpf oge, %25, %52 : vector<8x128xf32>
      %cst_26 = arith.constant -1.000000e+30 : f32
      %54 = vector.broadcast %cst_26 : f32 to vector<8x128xf32>
      %55 = arith.select %53, %25, %54 : vector<8x128xi1>, vector<8x128xf32>
      %56 = arith.index_cast %arg6 : i32 to index
      %c0_27 = arith.constant 0 : index
      %c0_28 = arith.constant 0 : index
      %57 = vector.load %arg4[%56, %c0_27, %c0_28] : memref<8x8x128xf32, #tpu.memory_space<vmem>>, vector<1x8x128xf32>
      %58 = vector.shape_cast %57 : vector<1x8x128xf32> to vector<8x128xf32>
      %59 = arith.addf %55, %58 : vector<8x128xf32>
      %cst_29 = arith.constant dense<0xFF800000> : vector<8xf32>
      %60 = vector.multi_reduction <maximumf>, %59, %cst_29 [1] : vector<8x128xf32> to vector<8xf32>
      %61 = vector.shape_cast %60 : vector<8xf32> to vector<8x1xf32>
      %62 = vector.broadcast %61 : vector<8x1xf32> to vector<8x128xf32>
      %63 = arith.cmpf oge, %59, %62 : vector<8x128xf32>
      %c128_i32 = arith.constant 128 : i32
      %64 = vector.broadcast %c128_i32 : i32 to vector<8x128xi32>
      %65 = arith.select %63, %0, %64 : vector<8x128xi1>, vector<8x128xi32>
      %cst_30 = arith.constant dense<2147483647> : vector<8xi32>
      %66 = vector.multi_reduction <minsi>, %65, %cst_30 [1] : vector<8x128xi32> to vector<8xi32>
      %67 = vector.shape_cast %66 : vector<8xi32> to vector<8x1xi32>
      %c0_i32_31 = arith.constant 0 : i32
      %68 = vector.broadcast %c0_i32_31 : i32 to vector<8x1xi32>
      %69 = arith.cmpi sgt, %arg9, %68 : vector<8x1xi32>
      %c0_i32_32 = arith.constant 0 : i32
      %70 = vector.broadcast %c0_i32_32 : i32 to vector<8x1xi32>
      %71 = arith.select %69, %70, %67 : vector<8x1xi1>, vector<8x1xi32>
      %c2_i32_33 = arith.constant 2 : i32
      %72 = vector.broadcast %c2_i32_33 : i32 to vector<8x1xi32>
      %73 = arith.cmpi eq, %71, %72 : vector<8x1xi32>
      %c1_i32_34 = arith.constant 1 : i32
      %74 = vector.broadcast %c1_i32_34 : i32 to vector<8x1xi32>
      %75 = arith.select %73, %74, %arg9 : vector<8x1xi1>, vector<8x1xi32>
      %76 = vector.broadcast %arg6 : i32 to vector<8x8xi32>
      %77 = arith.cmpi eq, %1, %76 : vector<8x8xi32>
      %78 = vector.shape_cast %71 : vector<8x1xi32> to vector<8x1xi32>
      %79 = vector.broadcast %78 : vector<8x1xi32> to vector<8x8xi32>
      %80 = arith.select %77, %79, %arg10 : vector<8x8xi1>, vector<8x8xi32>
      %c0_i32_35 = arith.constant 0 : i32
      %81 = vector.broadcast %c0_i32_35 : i32 to vector<8x1xi32>
      %82 = arith.cmpi sgt, %75, %81 : vector<8x1xi32>
      %c0_i32_36 = arith.constant 0 : i32
      %83 = vector.broadcast %c0_i32_36 : i32 to vector<8x1xi32>
      %84 = arith.select %82, %83, %71 : vector<8x1xi1>, vector<8x1xi32>
      %85 = vector.broadcast %84 : vector<8x1xi32> to vector<8x128xi32>
      %86 = arith.cmpi eq, %0, %85 : vector<8x128xi32>
      %87 = arith.extui %86 : vector<8x128xi1> to vector<8x128xi32>
      %88 = arith.sitofp %87 : vector<8x128xi32> to vector<8x128xf32>
      %c0_37 = arith.constant 0 : index
      %c0_38 = arith.constant 0 : index
      %89 = vector.load %arg1[%c0_37, %c0_38] : memref<128x32xf32, #tpu.memory_space<vmem>>, vector<128x32xf32>
      %cst_39 = arith.constant dense<0.000000e+00> : vector<8x32xf32>
      %90 = tpu.matmul %88, %89, %cst_39 {dimension_numbers = #tpu.dot_dimension_numbers<[1], [0], [0], [1], [0, 0, 1, 1], [], []>} : vector<8x128xf32>, vector<128x32xf32>, vector<8x32xf32> -> vector<8x32xf32>
      scf.yield %17, %90, %75, %80 : vector<8x32xf32>, vector<8x32xf32>, vector<8x1xi32>, vector<8x8xi32>
    }
    %c8_i32_6 = arith.constant 8 : i32
    %c0_7 = arith.constant 0 : index
    %c0_8 = arith.constant 0 : index
    %13 = vector.load %arg5[%c0_7, %c0_8] : memref<8x8xi32, #tpu.memory_space<vmem>>, vector<8x8xi32>
    tpu.vector_store %arg5[%c0_7, %c0_8], %12#3 {strides = array<i32>} : memref<8x8xi32, #tpu.memory_space<vmem>>, vector<8x8xi32>,
    return
  }
}

</mosaic_0001>

<llo_original>
// kernel: generate.1
$region0: #{generate.1}
  #allocation0 [shape = 'u32[]', space=smem, size = 0x4, offset = 0x4, fixed_abs, tag = 'smem constant byte address 0x4 - core index']
  #allocation1 [shape = 'u32[144,128]{1,0:T(1,128)}', space=vmem, size = 0x12000, scoped, tag = 'internal scratch']
  %s0 = inlined_call_operand.vmem [shape: f32[4,8,32], index: 0, kind: input, shape index: {}]
  %s1 = inlined_call_operand.vmem [shape: f32[128,32], index: 1, kind: input, shape index: {}]
  %s2 = inlined_call_operand.vmem [shape: f32[32,32], index: 2, kind: input, shape index: {}]
  %s3 = inlined_call_operand.vmem [shape: f32[32,128], index: 3, kind: input, shape index: {}]
  %s4 = inlined_call_operand.vmem [shape: f32[8,8,128], index: 4, kind: input, shape index: {}]
  %s5 = inlined_call_operand.vmem [shape: s32[8,8], index: 5, kind: output, shape index: {}]
  %s6 = sld [smem:[#allocation0]]
  $region44: #{generate.1} parent=0
    _
  %s8 = ssub.s32 1, %s6
  %s9 = scalar_select 0, %s8, %s6
  // Predicated region
  $region2: #{generate.1} parent=0 // pred_check
    _
  $region3: #{generate.1} parent=0 // pred_check_branch
    %11 = sbr.rel (0) target = $region5
  $region4: #{generate.1} parent=0 // pred_region
    _
  $region5: #{generate.1} parent=0 // pred_fallthru
    _
  // Predicated region
  $region6: #{generate.1} parent=0 // pred_check
    _
  $region7: #{generate.1} parent=0 // pred_check_branch
    %13 = sbr.rel (0) target = $region9
  $region8: #{generate.1} parent=0 // pred_region
    _
  $region9: #{generate.1} parent=0 // pred_fallthru
    _
  // Predicated region
  $region10: #{generate.1} parent=0 // pred_check
    _
  $region11: #{generate.1} parent=0 // pred_check_branch
    %15 = sbr.rel (0) target = $region13
  $region12: #{generate.1} parent=0 // pred_region
    _
  $region13: #{generate.1} parent=0 // pred_fallthru
    _
  // Predicated region
  $region14: #{generate.1} parent=0 // pred_check
    _
  $region15: #{generate.1} parent=0 // pred_check_branch
    %17 = sbr.rel (0) target = $region17
  $region16: #{generate.1} parent=0 // pred_region
    _
  $region17: #{generate.1} parent=0 // pred_fallthru
    _
  // Predicated region
  $region18: #{generate.1} parent=0 // pred_check
    _
  $region19: #{generate.1} parent=0 // pred_check_branch
    %19 = sbr.rel (0) target = $region21
  $region20: #{generate.1} parent=0 // pred_region
    _
  $region21: #{generate.1} parent=0 // pred_fallthru
    _
  %v20 = vlaneseq
  %v21 = vand.u32 %v20, 127
  %vm22 = vcmp.eq.s32.totalorder %v21, 2
  loop: start=0, step=1, limit=3
  $region22: #{generate.1} parent=0 // loop_pre_header
    _
  $region23: #{generate.1} parent=0 // loop_header
    %s24 = sphi 0, %s28
    %p25 = scmp.ge.s32.totalorder %s24, 3
    %v29 = vphi 0.0, %v111
  $region24: #{generate.1} parent=0 // loop_header_branch
    %27 = sbr.rel (%p25) target = $region28
  $region25: #{generate.1} parent=0 // loop_body
    %s30 = smul.u32 %s24, 8
    %s31 = scalar_lea.vmem %s0, %s30
    %v32 = vld [vmem:[%s31] sm:$0xff]
    %v33 = vld [vmem:[%s2] sm:$0xff]
    %v34 = vld [vmem:[%s2 + $0x8] sm:$0xff]
    %v35 = vld [vmem:[%s2 + $0x10] sm:$0xff]
    %v36 = vld [vmem:[%s2 + $0x18] sm:$0xff]
    %vm37 = vcmask 261120
    %v39 = vsel %vm37, %v29, 0
    %41 = vmatprep.subr.mxu0 0.0
    %42 = vmatpush1.msra.mxu0 0.0
    %43 = vmatprep.subr.mxu0 0.0
    %44 = vmatpush1.msra.mxu0 0.0
    %45 = vmatprep.subr.mxu0 0.0
    %46 = vmatpush1.msra.mxu0 0.0
    %47 = vmatprep.subr.mxu0 0.0
    %48 = vmatpush1.msra.mxu0 0.0
    %49 = vmatprep.subr.mxu0 0.0
    %50 = vmatpush1.msra.mxu0 0.0
    %51 = vmatprep.subr.mxu0 0.0
    %52 = vmatpush1.msra.mxu0 0.0
    %53 = vmatprep.subr.mxu0 0.0
    %54 = vmatpush1.msra.mxu0 0.0
    %55 = vmatprep.subr.mxu0 0.0
    %56 = vmatpush1.msra.mxu0 0.0
    %57 = vmatprep.subr.mxu0 0.0
    %58 = vmatpush1.msra.mxu0 0.0
    %59 = vmatprep.subr.mxu0 0.0
    %60 = vmatpush1.msra.mxu0 0.0
    %61 = vmatprep.subr.mxu0 0.0
    %62 = vmatpush1.msra.mxu0 0.0
    %63 = vmatprep.subr.mxu0 0.0
    %64 = vmatpush1.msra.mxu0 0.0
    %65 = vmatprep.subr.mxu0 0.0
    %66 = vmatpush1.msra.mxu0 %v36
    %67 = vmatprep.subr.mxu0 0.0
    %68 = vmatpush1.msra.mxu0 %v35
    %69 = vmatprep.subr.mxu0 0.0
    %70 = vmatpush1.msra.mxu0 %v34
    %71 = vmatprep.subr.mxu0 0.0
    %72 = vmatpush1.msra.mxu0 %v33
    %73 = vmatprep.subr.mxu0 0.0
    %74 = vmatpush2.msra.mxu0 0.0
    %75 = vmatprep.subr.mxu0 0.0
    %76 = vmatpush2.msra.mxu0 0.0
    %77 = vmatprep.subr.mxu0 0.0
    %78 = vmatpush2.msra.mxu0 0.0
    %79 = vmatprep.subr.mxu0 0.0
    %80 = vmatpush2.msra.mxu0 0.0
    %81 = vmatprep.subr.mxu0 0.0
    %82 = vmatpush2.msra.mxu0 0.0
    %83 = vmatprep.subr.mxu0 0.0
    %84 = vmatpush2.msra.mxu0 0.0
    %85 = vmatprep.subr.mxu0 0.0
    %86 = vmatpush2.msra.mxu0 0.0
    %87 = vmatprep.subr.mxu0 0.0
    %88 = vmatpush2.msra.mxu0 0.0
    %89 = vmatprep.subr.mxu0 0.0
    %90 = vmatpush2.msra.mxu0 0.0
    %91 = vmatprep.subr.mxu0 0.0
    %92 = vmatpush2.msra.mxu0 0.0
    %93 = vmatprep.subr.mxu0 0.0
    %94 = vmatpush2.msra.mxu0 0.0
    %95 = vmatprep.subr.mxu0 0.0
    %96 = vmatpush2.msra.mxu0 0.0
    %97 = vmatprep.subr.mxu0 0.0
    %98 = vmatpush2.msra.mxu0 0.0
    %99 = vmatprep.subr.mxu0 0.0
    %100 = vmatpush2.msra.mxu0 0.0
    %101 = vmatprep.subr.mxu0 0.0
    %102 = vmatpush2.msra.mxu0 0.0
    %103 = vmatprep.subr.mxu0 0.0
    %104 = vmatpush2.msra.mxu0 0.0
    %105 = vmatprep.mubr.f32.mxu0 0.0
    %106 = vmatmul.mubr.f32.gmra.mxu0 %v39
    %v107 = vpop.f32.mrf.mxu0
    %v108 = vadd.f32 %v32, %v107
    %v109 = vpop.f32.mrf.mxu0
    %110 = vdwg.mxu0
    %v111 = vtanh.pop %v108
  $region26: #{generate.1} parent=0 // loop_footer
    %s28 = sadd.s32 1, %s24
  $region27: #{generate.1} parent=0 // loop_footer_branch
    %23 = sbr.rel target = $region23
  $region28: #{generate.1} parent=0 // loop_exit
    _
  %s112 = scalar_lea.vmem %s0, 24
  %v113 = vld [vmem:[%s112] sm:$0xff]
  loop: start=0, step=1, limit=8
  $region29: #{generate.1} parent=0 // loop_pre_header
    _
  $region30: #{generate.1} parent=0 // loop_header
    %s115 = sphi 0, %s119
    %p116 = scmp.ge.s32.totalorder %s115, 8
    %v120 = vphi %v29, %v202
    %v121 = vphi %v113, %v424
    %v122 = vphi 0, %v332
    %v123 = vphi 0, %v335
  $region31: #{generate.1} parent=0 // loop_header_branch
    %118 = sbr.rel (%p116) target = $region35
  $region32: #{generate.1} parent=0 // loop_body
    %v124 = vld [vmem:[%s2] sm:$0xff]
    %v125 = vld [vmem:[%s2 + $0x8] sm:$0xff]
    %v126 = vld [vmem:[%s2 + $0x10] sm:$0xff]
    %v127 = vld [vmem:[%s2 + $0x18] sm:$0xff]
    %vm128 = vcmask 261120
    %v130 = vsel %vm128, %v120, 0
    %132 = vmatprep.subr.mxu0 0.0
    %133 = vmatpush1.msra.mxu0 0.0
    %134 = vmatprep.subr.mxu0 0.0
    %135 = vmatpush1.msra.mxu0 0.0
    %136 = vmatprep.subr.mxu0 0.0
    %137 = vmatpush1.msra.mxu0 0.0
    %138 = vmatprep.subr.mxu0 0.0
    %139 = vmatpush1.msra.mxu0 0.0
    %140 = vmatprep.subr.mxu0 0.0
    %141 = vmatpush1.msra.mxu0 0.0
    %142 = vmatprep.subr.mxu0 0.0
    %143 = vmatpush1.msra.mxu0 0.0
    %144 = vmatprep.subr.mxu0 0.0
    %145 = vmatpush1.msra.mxu0 0.0
    %146 = vmatprep.subr.mxu0 0.0
    %147 = vmatpush1.msra.mxu0 0.0
    %148 = vmatprep.subr.mxu0 0.0
    %149 = vmatpush1.msra.mxu0 0.0
    %150 = vmatprep.subr.mxu0 0.0
    %151 = vmatpush1.msra.mxu0 0.0
    %152 = vmatprep.subr.mxu0 0.0
    %153 = vmatpush1.msra.mxu0 0.0
    %154 = vmatprep.subr.mxu0 0.0
    %155 = vmatpush1.msra.mxu0 0.0
    %156 = vmatprep.subr.mxu0 0.0
    %157 = vmatpush1.msra.mxu0 %v127
    %158 = vmatprep.subr.mxu0 0.0
    %159 = vmatpush1.msra.mxu0 %v126
    %160 = vmatprep.subr.mxu0 0.0
    %161 = vmatpush1.msra.mxu0 %v125
    %162 = vmatprep.subr.mxu0 0.0
    %163 = vmatpush1.msra.mxu0 %v124
    %164 = vmatprep.subr.mxu0 0.0
    %165 = vmatpush2.msra.mxu0 0.0
    %166 = vmatprep.subr.mxu0 0.0
    %167 = vmatpush2.msra.mxu0 0.0
    %168 = vmatprep.subr.mxu0 0.0
    %169 = vmatpush2.msra.mxu0 0.0
    %170 = vmatprep.subr.mxu0 0.0
    %171 = vmatpush2.msra.mxu0 0.0
    %172 = vmatprep.subr.mxu0 0.0
    %173 = vmatpush2.msra.mxu0 0.0
    %174 = vmatprep.subr.mxu0 0.0
    %175 = vmatpush2.msra.mxu0 0.0
    %176 = vmatprep.subr.mxu0 0.0
    %177 = vmatpush2.msra.mxu0 0.0
    %178 = vmatprep.subr.mxu0 0.0
    %179 = vmatpush2.msra.mxu0 0.0
    %180 = vmatprep.subr.mxu0 0.0
    %181 = vmatpush2.msra.mxu0 0.0
    %182 = vmatprep.subr.mxu0 0.0
    %183 = vmatpush2.msra.mxu0 0.0
    %184 = vmatprep.subr.mxu0 0.0
    %185 = vmatpush2.msra.mxu0 0.0
    %186 = vmatprep.subr.mxu0 0.0
    %187 = vmatpush2.msra.mxu0 0.0
    %188 = vmatprep.subr.mxu0 0.0
    %189 = vmatpush2.msra.mxu0 0.0
    %190 = vmatprep.subr.mxu0 0.0
    %191 = vmatpush2.msra.mxu0 0.0
    %192 = vmatprep.subr.mxu0 0.0
    %193 = vmatpush2.msra.mxu0 0.0
    %194 = vmatprep.subr.mxu0 0.0
    %195 = vmatpush2.msra.mxu0 0.0
    %196 = vmatprep.mubr.f32.mxu0 0.0
    %197 = vmatmul.mubr.f32.gmra.mxu0 %v130
    %v198 = vpop.f32.mrf.mxu0
    %v199 = vadd.f32 %v121, %v198
    %v200 = vpop.f32.mrf.mxu0
    %201 = vdwg.mxu0
    %v202 = vtanh.pop %v199
    %v203 = vld [vmem:[%s3] sm:$0xff]
    %v204 = vld [vmem:[%s3 + $0x8] sm:$0xff]
    %v205 = vld [vmem:[%s3 + $0x10] sm:$0xff]
    %v206 = vld [vmem:[%s3 + $0x18] sm:$0xff]
    %v208 = vsel %vm128, %v202, 0
    %210 = vmatprep.subr.mxu0 0.0
    %211 = vmatpush1.msra.mxu0 0.0
    %212 = vmatprep.subr.mxu0 0.0
    %213 = vmatpush1.msra.mxu0 0.0
    %214 = vmatprep.subr.mxu0 0.0
    %215 = vmatpush1.msra.mxu0 0.0
    %216 = vmatprep.subr.mxu0 0.0
    %217 = vmatpush1.msra.mxu0 0.0
    %218 = vmatprep.subr.mxu0 0.0
    %219 = vmatpush1.msra.mxu0 0.0
    %220 = vmatprep.subr.mxu0 0.0
    %221 = vmatpush1.msra.mxu0 0.0
    %222 = vmatprep.subr.mxu0 0.0
    %223 = vmatpush1.msra.mxu0 0.0
    %224 = vmatprep.subr.mxu0 0.0
    %225 = vmatpush1.msra.mxu0 0.0
    %226 = vmatprep.subr.mxu0 0.0
    %227 = vmatpush1.msra.mxu0 0.0
    %228 = vmatprep.subr.mxu0 0.0
    %229 = vmatpush1.msra.mxu0 0.0
    %230 = vmatprep.subr.mxu0 0.0
    %231 = vmatpush1.msra.mxu0 0.0
    %232 = vmatprep.subr.mxu0 0.0
    %233 = vmatpush1.msra.mxu0 0.0
    %234 = vmatprep.subr.mxu0 0.0
    %235 = vmatpush1.msra.mxu0 %v206
    %236 = vmatprep.subr.mxu0 0.0
    %237 = vmatpush1.msra.mxu0 %v205
    %238 = vmatprep.subr.mxu0 0.0
    %239 = vmatpush1.msra.mxu0 %v204
    %240 = vmatprep.subr.mxu0 0.0
    %241 = vmatpush1.msra.mxu0 %v203
    %242 = vmatprep.subr.mxu0 0.0
    %243 = vmatpush2.msra.mxu0 0.0
    %244 = vmatprep.subr.mxu0 0.0
    %245 = vmatpush2.msra.mxu0 0.0
    %246 = vmatprep.subr.mxu0 0.0
    %247 = vmatpush2.msra.mxu0 0.0
    %248 = vmatprep.subr.mxu0 0.0
    %249 = vmatpush2.msra.mxu0 0.0
    %250 = vmatprep.subr.mxu0 0.0
    %251 = vmatpush2.msra.mxu0 0.0
    %252 = vmatprep.subr.mxu0 0.0
    %253 = vmatpush2.msra.mxu0 0.0
    %254 = vmatprep.subr.mxu0 0.0
    %255 = vmatpush2.msra.mxu0 0.0
    %256 = vmatprep.subr.mxu0 0.0
    %257 = vmatpush2.msra.mxu0 0.0
    %258 = vmatprep.subr.mxu0 0.0
    %259 = vmatpush2.msra.mxu0 0.0
    %260 = vmatprep.subr.mxu0 0.0
    %261 = vmatpush2.msra.mxu0 0.0
    %262 = vmatprep.subr.mxu0 0.0
    %263 = vmatpush2.msra.mxu0 0.0
    %264 = vmatprep.subr.mxu0 0.0
    %265 = vmatpush2.msra.mxu0 0.0
    %266 = vmatprep.subr.mxu0 0.0
    %267 = vmatpush2.msra.mxu0 0.0
    %268 = vmatprep.subr.mxu0 0.0
    %269 = vmatpush2.msra.mxu0 0.0
    %270 = vmatprep.subr.mxu0 0.0
    %271 = vmatpush2.msra.mxu0 0.0
    %272 = vmatprep.subr.mxu0 0.0
    %273 = vmatpush2.msra.mxu0 0.0
    %274 = vmatprep.mubr.f32.mxu0 0.0
    %275 = vmatmul.mubr.f32.gmra.mxu0 %v208
    %v276 = vpop.f32.mrf.mxu0
    %v277 = vadd.f32 0.0, %v276
    %v278 = vpop.f32.mrf.mxu0
    %279 = vdwg.mxu0
    %s280 = sadd.s32 %s115, 4
    %p281 = scmp.lt.s32.totalorder %s280, 3
    %s282 = scalar_select %p281, 1, 0
    %v283 = vstv %s282
    %vm284 = vcmp.eq.s32.totalorder %v283, 1
    %vm285 = vmand %vm284, %vm22
    %v286 = vsel %vm285, -1e+30, %v277
    %287 = vmax.xlane.f32.xlu0 %v286
    %v288 = vpop.xlane.xlu0 %287
    %vm289 = vcmp.ge.f32.partialorder %v286, %v288
    %v290 = vsel %vm289, -1e+30, %v286
    %291 = vmax.xlane.f32.xlu0 %v290
    %v292 = vpop.xlane.xlu0 %291
    %vm293 = vcmp.ge.f32.partialorder %v290, %v292
    %v294 = vsel %vm293, -1e+30, %v290
    %295 = vmax.xlane.f32.xlu0 %v294
    %v296 = vpop.xlane.xlu0 %295
    %vm297 = vcmp.ge.f32.partialorder %v294, %v296
    %v298 = vsel %vm297, -1e+30, %v294
    %299 = vmax.xlane.f32.xlu0 %v298
    %v300 = vpop.xlane.xlu0 %299
    %vm301 = vcmp.ge.f32.partialorder %v298, %v300
    %v302 = vsel %vm301, -1e+30, %v298
    %303 = vmax.xlane.f32.xlu0 %v302
    %v304 = vpop.xlane.xlu0 %303
    %vm305 = vcmp.ge.f32.partialorder %v286, %v304
    %v306 = vsel %vm305, %v286, -1e+30
    %s307 = smul.u32 %s115, 8
    %s308 = scalar_lea.vmem %s4, %s307
    %v309 = vld [vmem:[%s308] sm:$0xff]
    %v310 = vadd.f32 %v306, %v309
    %311 = vmax.xlane.f32.xlu0 %v310
    %v312 = vpop.xlane.xlu0 %311
    %vm313 = vcmp.ge.f32.partialorder %v310, %v312
    %v314 = vsel %vm313, %v21, 128
    %v315 = vand.u32 %v314, 65535
    %v316 = vshra.s32 %v314, 16
    %v317 = vcvt.s32.f32 %v315
    %v318 = vcvt.s32.f32 %v316
    %319 = vmin.xlane.f32.xlu0 %v318
    %v320 = vpop.xlane.xlu0 %319
    %vm321 = vcmp.eq.f32.partialorder %v318, %v320
    %v322 = vsel %vm321, %v317, inf
    %323 = vmin.xlane.f32.xlu0 %v322
    %v324 = vpop.xlane.xlu0 %323
    %v325 = vcvt.f32.s32 %v324
    %v326 = vcvt.f32.s32 %v320
    %v327 = vshll.u32 %v326, 16
    %v328 = vadd.s32 %v327, %v325
    %vm329 = vcmp.gt.s32.totalorder %v122, 0
    %v330 = vsel %vm329, 0, %v328
    %vm331 = vcmp.eq.s32.totalorder %v330, 2
    %v332 = vsel %vm331, 1, %v122
    %v333 = vstv %s115
    %vm334 = vcmp.eq.s32.totalorder %v21, %v333
    %v335 = vsel %vm334, %v330, %v123
    %vm336 = vcmp.gt.s32.totalorder %v332, 0
    %v337 = vsel %vm336, 0, %v330
    %vm338 = vcmp.eq.s32.totalorder %v21, %v337
    %v339 = vsel %vm338, 1, 0
    %v340 = vcvt.s32.f32 %v339
    %v341 = vld [vmem:[%s1] sm:$0xff]
    %v342 = vld [vmem:[%s1 + $0x8] sm:$0xff]
    %v343 = vld [vmem:[%s1 + $0x10] sm:$0xff]
    %v344 = vld [vmem:[%s1 + $0x18] sm:$0xff]
    %v345 = vld [vmem:[%s1 + $0x20] sm:$0xff]
    %v346 = vld [vmem:[%s1 + $0x28] sm:$0xff]
    %v347 = vld [vmem:[%s1 + $0x30] sm:$0xff]
    %v348 = vld [vmem:[%s1 + $0x38] sm:$0xff]
    %v349 = vld [vmem:[%s1 + $0x40] sm:$0xff]
    %v350 = vld [vmem:[%s1 + $0x48] sm:$0xff]
    %v351 = vld [vmem:[%s1 + $0x50] sm:$0xff]
    %v352 = vld [vmem:[%s1 + $0x58] sm:$0xff]
    %v353 = vld [vmem:[%s1 + $0x60] sm:$0xff]
    %v354 = vld [vmem:[%s1 + $0x68] sm:$0xff]
    %v355 = vld [vmem:[%s1 + $0x70] sm:$0xff]
    %v356 = vld [vmem:[%s1 + $0x78] sm:$0xff]
    %357 = vmatprep.subr.mxu0 0.0
    %358 = vmatpush1.msra.mxu0 %v356
    %359 = vmatprep.subr.mxu0 0.0
    %360 = vmatpush1.msra.mxu0 %v355
    %361 = vmatprep.subr.mxu0 0.0
    %362 = vmatpush1.msra.mxu0 %v354
    %363 = vmatprep.subr.mxu0 0.0
    %364 = vmatpush1.msra.mxu0 %v353
    %365 = vmatprep.subr.mxu0 0.0
    %366 = vmatpush1.msra.mxu0 %v352
    %367 = vmatprep.subr.mxu0 0.0
    %368 = vmatpush1.msra.mxu0 %v351
    %369 = vmatprep.subr.mxu0 0.0
    %370 = vmatpush1.msra.mxu0 %v350
    %371 = vmatprep.subr.mxu0 0.0
    %372 = vmatpush1.msra.mxu0 %v349
    %373 = vmatprep.subr.mxu0 0.0
    %374 = vmatpush1.msra.mxu0 %v348
    %375 = vmatprep.subr.mxu0 0.0
    %376 = vmatpush1.msra.mxu0 %v347
    %377 = vmatprep.subr.mxu0 0.0
    %378 = vmatpush1.msra.mxu0 %v346
    %379 = vmatprep.subr.mxu0 0.0
    %380 = vmatpush1.msra.mxu0 %v345
    %381 = vmatprep.subr.mxu0 0.0
    %382 = vmatpush1.msra.mxu0 %v344
    %383 = vmatprep.subr.mxu0 0.0
    %384 = vmatpush1.msra.mxu0 %v343
    %385 = vmatprep.subr.mxu0 0.0
    %386 = vmatpush1.msra.mxu0 %v342
    %387 = vmatprep.subr.mxu0 0.0
    %388 = vmatpush1.msra.mxu0 %v341
    %389 = vmatprep.subr.mxu0 0.0
    %390 = vmatpush2.msra.mxu0 0.0
    %391 = vmatprep.subr.mxu0 0.0
    %392 = vmatpush2.msra.mxu0 0.0
    %393 = vmatprep.subr.mxu0 0.0
    %394 = vmatpush2.msra.mxu0 0.0
    %395 = vmatprep.subr.mxu0 0.0
    %396 = vmatpush2.msra.mxu0 0.0
    %397 = vmatprep.subr.mxu0 0.0
    %398 = vmatpush2.msra.mxu0 0.0
    %399 = vmatprep.subr.mxu0 0.0
    %400 = vmatpush2.msra.mxu0 0.0
    %401 = vmatprep.subr.mxu0 0.0
    %402 = vmatpush2.msra.mxu0 0.0
    %403 = vmatprep.subr.mxu0 0.0
    %404 = vmatpush2.msra.mxu0 0.0
    %405 = vmatprep.subr.mxu0 0.0
    %406 = vmatpush2.msra.mxu0 0.0
    %407 = vmatprep.subr.mxu0 0.0
    %408 = vmatpush2.msra.mxu0 0.0
    %409 = vmatprep.subr.mxu0 0.0
    %410 = vmatpush2.msra.mxu0 0.0
    %411 = vmatprep.subr.mxu0 0.0
    %412 = vmatpush2.msra.mxu0 0.0
    %413 = vmatprep.subr.mxu0 0.0
    %414 = vmatpush2.msra.mxu0 0.0
    %415 = vmatprep.subr.mxu0 0.0
    %416 = vmatpush2.msra.mxu0 0.0
    %417 = vmatprep.subr.mxu0 0.0
    %418 = vmatpush2.msra.mxu0 0.0
    %419 = vmatprep.subr.mxu0 0.0
    %420 = vmatpush2.msra.mxu0 0.0
    %421 = vmatprep.mubr.f32.mxu0 0.0
    %422 = vmatmul.mubr.f32.gmra.mxu0 %v340
    %v423 = vpop.f32.mrf.mxu0
    %v424 = vadd.f32 0.0, %v423
    %v425 = vpop.f32.mrf.mxu0
    %426 = vdwg.mxu0
  $region33: #{generate.1} parent=0 // loop_footer
    %s119 = sadd.s32 1, %s115
  $region34: #{generate.1} parent=0 // loop_footer_branch
    %114 = sbr.rel target = $region30
  $region35: #{generate.1} parent=0 // loop_exit
    _
  %vm427 = vcmask 64512
  %428 = vst.msk [vmem:[%s5] sm:$0xff] %vm427, %v123
  // Predicated region
  $region36: #{generate.1} parent=0 // pred_check
    _
  $region37: #{generate.1} parent=0 // pred_check_branch
    %430 = sbr.rel (0) target = $region39
  $region38: #{generate.1} parent=0 // pred_region
    _
  $region39: #{generate.1} parent=0 // pred_fallthru
    _
  // Predicated region
  $region40: #{generate.1} parent=0 // pred_check
    _
  $region41: #{generate.1} parent=0 // pred_check_branch
    %432 = sbr.rel (0) target = $region43
  $region42: #{generate.1} parent=0 // pred_region
    _
  $region43: #{generate.1} parent=0 // pred_fallthru
    _

</llo_original>
